<compile_context>
chip_gen: v5e
topology: v5e:2x2
jax: 0.10.0
libtpu: 0.0.40
codegen_flags: <defaults>
</compile_context>

<pallas_src>
import functools
import math

import jax
import jax.numpy as jnp
from jax import lax
from jax.experimental import pallas as pl
from jax.experimental.pallas import tpu as pltpu


def _round_up(x: int, m: int) -> int:
    return (x + m - 1) // m * m


# ----------------------------------------------------------------------------
# Tiled linear projection kernels (to_out / fallback path)
# ----------------------------------------------------------------------------
def _linear_kernel(x_ref, w_ref, o_ref, acc_ref):
    @pl.when(pl.program_id(2) == 0)
    def _():
        acc_ref[...] = jnp.zeros_like(acc_ref)

    acc_ref[...] += jnp.dot(x_ref[...], w_ref[...],
                            preferred_element_type=jnp.float32)

    @pl.when(pl.program_id(2) == pl.num_programs(2) - 1)
    def _():
        o_ref[...] = acc_ref[...].astype(o_ref.dtype)


def _linear_bias_kernel(x_ref, w_ref, b_ref, o_ref, acc_ref):
    @pl.when(pl.program_id(2) == 0)
    def _():
        acc_ref[...] = jnp.zeros_like(acc_ref)

    acc_ref[...] += jnp.dot(x_ref[...], w_ref[...],
                            preferred_element_type=jnp.float32)

    @pl.when(pl.program_id(2) == pl.num_programs(2) - 1)
    def _():
        o_ref[...] = (acc_ref[...] + b_ref[...]).astype(o_ref.dtype)


def pallas_linear(x, w, b=None, *, out_dtype=jnp.float32,
                  tm=512, tk=1024, tn=512):
    """(M,K)@(K,N) [+ bias] on bf16 MXU operands with an fp32 accumulator.

    Tile dims are either full array dims (small shapes) or aligned fixed
    tiles; only the contraction axis is ever zero-padded (rare, K > tk).
    """
    M, K = x.shape
    Kw, N = w.shape
    assert K == Kw
    tm = M if M <= tm else tm
    tn = N if N <= tn else tn
    tk = K if K <= tk else tk

    xb = x.astype(jnp.bfloat16)
    wb = w.astype(jnp.bfloat16)
    Kp = _round_up(K, tk)
    if Kp != K:  # contraction axis must tile exactly (zeros contribute 0)
        xb = jnp.pad(xb, ((0, 0), (0, Kp - K)))
        wb = jnp.pad(wb, ((0, Kp - K), (0, 0)))

    in_specs = [
        pl.BlockSpec((tm, tk), lambda i, j, k: (i, k)),
        pl.BlockSpec((tk, tn), lambda i, j, k: (k, j)),
    ]
    if b is None:
        kernel = _linear_kernel
        args = (xb, wb)
    else:
        kernel = _linear_bias_kernel
        args = (xb, wb, b.reshape(1, N).astype(jnp.float32))
        in_specs.append(pl.BlockSpec((1, tn), lambda i, j, k: (0, j)))

    return pl.pallas_call(
        kernel,
        out_shape=jax.ShapeDtypeStruct((M, N), out_dtype),
        grid=(pl.cdiv(M, tm), pl.cdiv(N, tn), Kp // tk),
        in_specs=in_specs,
        out_specs=pl.BlockSpec((tm, tn), lambda i, j, k: (i, j)),
        scratch_shapes=[pltpu.VMEM((tm, tn), jnp.float32)],
        compiler_params=pltpu.CompilerParams(
            dimension_semantics=("parallel", "parallel", "arbitrary")),
    )(*args)


# ----------------------------------------------------------------------------
# Fused LayerNorm + projection kernel (to_q / to_kv, K fits one tile)
# ----------------------------------------------------------------------------
def _ln_linear_kernel(x_ref, lnw_ref, lnb_ref, w_ref, o_ref, *, eps):
    x = x_ref[...]                                   # (tm, K) f32
    mu = jnp.mean(x, axis=-1, keepdims=True)
    xc = x - mu
    var = jnp.mean(xc * xc, axis=-1, keepdims=True)
    xn = xc * lax.rsqrt(var + eps) * lnw_ref[...] + lnb_ref[...]
    o_ref[...] = jnp.dot(xn.astype(jnp.bfloat16), w_ref[...],
                         preferred_element_type=jnp.float32).astype(o_ref.dtype)


def pallas_ln_linear(x, ln_w, ln_b, w, *, eps=1e-5, out_dtype=jnp.bfloat16,
                     tm=256, tn=512):
    """LayerNorm(x) @ w with the LN fused in-kernel (single K block)."""
    M, K = x.shape
    Kw, N = w.shape
    assert K == Kw
    tm = M if M <= tm else tm
    tn = N if N <= tn else tn

    kernel = functools.partial(_ln_linear_kernel, eps=eps)
    return pl.pallas_call(
        kernel,
        out_shape=jax.ShapeDtypeStruct((M, N), out_dtype),
        grid=(pl.cdiv(M, tm), pl.cdiv(N, tn)),
        in_specs=[
            pl.BlockSpec((tm, K), lambda i, j: (i, 0)),
            pl.BlockSpec((1, K), lambda i, j: (0, 0)),
            pl.BlockSpec((1, K), lambda i, j: (0, 0)),
            pl.BlockSpec((K, tn), lambda i, j: (0, j)),
        ],
        out_specs=pl.BlockSpec((tm, tn), lambda i, j: (i, j)),
        compiler_params=pltpu.CompilerParams(
            dimension_semantics=("parallel", "parallel")),
    )(x.astype(jnp.float32),
      ln_w.reshape(1, K).astype(jnp.float32),
      ln_b.reshape(1, K).astype(jnp.float32),
      w.astype(jnp.bfloat16))


# ----------------------------------------------------------------------------
# Rotary cross-attention kernel (flash-style over KV tiles)
# ----------------------------------------------------------------------------
def _rotary_flash_attn_kernel(q_ref, kv_ref, cq_ref, sq_ref, ck_ref, sk_ref,
                              mask_ref, o_ref, qrot_ref, m_ref, l_ref, acc_ref,
                              *, num_heads: int, head_dim: int,
                              rotate_value: bool, scale: float,
                              num_keys: int, tile_k: int, guard_tail: bool):
    # q_ref  : (1, tq, H*D) bf16     kv_ref : (1, tk, 2*H*D) bf16  [k | v]
    # cq/sq  : (1, tq, D) f32        ck/sk  : (1, tk, D) f32
    # mask   : (1, 1, tk) int32      o_ref  : (1, tq, H*D) bf16
    # qrot   : (H, tq, D) bf16       m/l    : (H, tq, 1) f32
    # acc    : (H, tq, D) f32   (lane-offset-0 per-head accesses)
    H, D = num_heads, head_dim
    HD = H * D
    half = D // 2
    ki = pl.program_id(2)

    def rot(x, c, s):
        # rotate_half(x) = concat(-x2, x1)
        xr = jnp.concatenate([-x[:, half:], x[:, :half]], axis=-1)
        return x * c + xr * s

    @pl.when(ki == 0)
    def _():
        m_ref[...] = jnp.full_like(m_ref, -1e30)
        l_ref[...] = jnp.zeros_like(l_ref)
        acc_ref[...] = jnp.zeros_like(acc_ref)
        # Rotated + 1/sqrt(D)-scaled q, computed once per (batch, q-tile) and
        # kept resident in a lane-aligned (H, tq, D) bf16 scratch.
        for h in range(H):
            qh = q_ref[0, :, h * D:(h + 1) * D].astype(jnp.float32) * scale
            qrot_ref[h] = rot(qh, cq_ref[0], sq_ref[0]).astype(jnp.bfloat16)

    # Key validity: user mask (1 = attend) AND, for a ragged last kv tile, an
    # in-bounds check that replaces any wrapper-side padding of the KV tensor.
    mvalid = mask_ref[0] != 0                                        # (1, tk)
    if guard_tail:
        col = ki * tile_k + lax.broadcasted_iota(jnp.int32, (1, tile_k), 1)
        mvalid = jnp.logical_and(mvalid, col < num_keys)
        colv = ki * tile_k + lax.broadcasted_iota(jnp.int32, (tile_k, 1), 0)
        vvalid = colv < num_keys

    for h in range(H):
        ck = ck_ref[0]
        sk = sk_ref[0]
        kh = rot(kv_ref[0, :, h * D:(h + 1) * D], ck, sk).astype(jnp.bfloat16)
        vh = kv_ref[0, :, HD + h * D:HD + (h + 1) * D]      # native bf16
        if rotate_value:
            vh = rot(vh, ck, sk)
        if guard_tail:
            # OOB kv rows may contain garbage (NaN/inf); zero them so rows
            # with p == 0 cannot poison the PV matmul.
            vh = jnp.where(vvalid, vh, 0.0)
        vh = vh.astype(jnp.bfloat16)

        # (tq, D) x (tk, D)^T on the MXU, bf16 operands, f32 accumulation.
        s = lax.dot_general(qrot_ref[h], kh, (((1,), (1,)), ((), ())),
                            preferred_element_type=jnp.float32)     # (tq, tk)
        # select (not add) so garbage scores at masked/OOB keys are replaced;
        # -1e30 (not -inf) keeps fully-masked tiles NaN-free, and a later
        # valid tile wipes their contribution via alpha = exp(-1e30 - m) = 0.
        s = jnp.where(mvalid, s, -1e30)

        m_prev = m_ref[h]
        m_new = jnp.maximum(m_prev, jnp.max(s, axis=-1, keepdims=True))
        alpha = jnp.exp(m_prev - m_new)
        p = jnp.exp(s - m_new)                                       # f32
        l_ref[h] = alpha * l_ref[h] + jnp.sum(p, axis=-1, keepdims=True)
        acc_ref[h] = alpha * acc_ref[h] + jnp.dot(
            p.astype(jnp.bfloat16), vh, preferred_element_type=jnp.float32)
        m_ref[h] = m_new

    @pl.when(ki == pl.num_programs(2) - 1)
    def _():
        outs = []
        for h in range(H):
            oh = acc_ref[h] * pl.reciprocal(l_ref[h], approx=True)
            if rotate_value:
                # un-rotate with inverted angles: cos(-a)=cos(a), sin(-a)=-sin(a)
                oh = rot(oh, cq_ref[0], -sq_ref[0])
            outs.append(oh)
        # single lane-dense (tq, H*D) store
        o_ref[0] = jnp.concatenate(outs, axis=-1).astype(o_ref.dtype)


def rotary_attention_pallas(q, kv, cos_q, sin_q, cos_k, sin_k, mask, *,
                            num_heads: int, rotate_value: bool,
                            q_tile: int = 256, kv_tile: int = 512):
    """q: (B, Nq, H*D) bf16, kv: (B, Nk, 2*H*D) bf16 fused [k|v],
    cos/sin: (B, N, D) f32, mask: (B, Nk) int (1 = attend).
    Returns (B, Nq, H*D) in q.dtype."""
    B, Nq, HD = q.shape
    Nk = kv.shape[1]
    D = HD // num_heads
    scale = 1.0 / math.sqrt(D)

    tq = Nq if Nq <= q_tile else max(8, (q_tile // 8) * 8)
    # tk must be a multiple of 128 (mask block minor dim) unless it spans Nk.
    tk = Nk if Nk <= kv_tile else max(128, (kv_tile // 128) * 128)
    guard_tail = (Nk % tk) != 0

    mask3 = mask.reshape(B, 1, Nk).astype(jnp.int32)
    kernel = functools.partial(
        _rotary_flash_attn_kernel, num_heads=num_heads, head_dim=D,
        rotate_value=rotate_value, scale=scale, num_keys=Nk, tile_k=tk,
        guard_tail=guard_tail)

    return pl.pallas_call(
        kernel,
        out_shape=jax.ShapeDtypeStruct((B, Nq, HD), q.dtype),
        grid=(B, pl.cdiv(Nq, tq), pl.cdiv(Nk, tk)),
        in_specs=[
            pl.BlockSpec((1, tq, HD), lambda b, qi, ki: (b, qi, 0)),
            pl.BlockSpec((1, tk, 2 * HD), lambda b, qi, ki: (b, ki, 0)),
            pl.BlockSpec((1, tq, D), lambda b, qi, ki: (b, qi, 0)),
            pl.BlockSpec((1, tq, D), lambda b, qi, ki: (b, qi, 0)),
            pl.BlockSpec((1, tk, D), lambda b, qi, ki: (b, ki, 0)),
            pl.BlockSpec((1, tk, D), lambda b, qi, ki: (b, ki, 0)),
            pl.BlockSpec((1, 1, tk), lambda b, qi, ki: (b, 0, ki)),
        ],
        out_specs=pl.BlockSpec((1, tq, HD), lambda b, qi, ki: (b, qi, 0)),
        scratch_shapes=[
            pltpu.VMEM((num_heads, tq, D), jnp.bfloat16),  # rotated, scaled q
            pltpu.VMEM((num_heads, tq, 1), jnp.float32),   # running max m
            pltpu.VMEM((num_heads, tq, 1), jnp.float32),   # running sum l
            pltpu.VMEM((num_heads, tq, D), jnp.float32),   # output accumulator
        ],
        compiler_params=pltpu.CompilerParams(
            dimension_semantics=("parallel", "parallel", "arbitrary")),
    )(q, kv, cos_q, sin_q, cos_k, sin_k, mask3)


# ----------------------------------------------------------------------------
# Module-level glue
# ----------------------------------------------------------------------------
_LN_FUSE_MAX_K = 2048


def layer_norm(x, w, b, eps=1e-5):
    mu = jnp.mean(x, axis=-1, keepdims=True)
    var = jnp.mean(jnp.square(x - mu), axis=-1, keepdims=True)
    return (x - mu) * lax.rsqrt(var + eps) * w + b


def _project_in(x2d, ln_w, ln_b, w):
    if x2d.shape[1] <= _LN_FUSE_MAX_K:
        return pallas_ln_linear(x2d, ln_w, ln_b, w)       # fused LN + matmul
    xn = layer_norm(x2d, ln_w, ln_b)                       # wide-feature fallback
    return pallas_linear(xn, w, out_dtype=jnp.bfloat16)


def init_params(key, *, dim, context_dim, heads, dim_head):
    inner = heads * dim_head
    ks = jax.random.split(key, 4)
    scale_q = 1.0 / math.sqrt(dim)
    scale_kv = 1.0 / math.sqrt(context_dim)
    scale_o = 1.0 / math.sqrt(inner)
    return dict(
        ln_q_w=jnp.ones((dim,), jnp.float32),
        ln_q_b=jnp.zeros((dim,), jnp.float32),
        ln_c_w=jnp.ones((context_dim,), jnp.float32),
        ln_c_b=jnp.zeros((context_dim,), jnp.float32),
        w_q=jax.random.uniform(ks[0], (dim, inner), jnp.float32, -scale_q, scale_q),
        w_kv=jax.random.uniform(ks[1], (context_dim, 2 * inner), jnp.float32,
                                -scale_kv, scale_kv),
        w_out=jax.random.uniform(ks[2], (inner, dim), jnp.float32, -scale_o, scale_o),
        b_out=jax.random.uniform(ks[3], (dim,), jnp.float32, -scale_o, scale_o),
    )


def rotary_cross_attention_forward(params, x_query, x_context, query_pos_emb,
                                   context_pos_emb, context_mask, *,
                                   heads: int, rotate_value: bool,
                                   q_tile: int = 256, kv_tile: int = 512):
    B, Nq, dim = x_query.shape
    Nc, ctx_dim = x_context.shape[1], x_context.shape[2]
    inner = params["w_q"].shape[1]

    # fused LayerNorm + projection -> bf16 activations for the MXU
    q = _project_in(x_query.reshape(B * Nq, dim), params["ln_q_w"],
                    params["ln_q_b"], params["w_q"]).reshape(B, Nq, inner)
    kv = _project_in(x_context.reshape(B * Nc, ctx_dim), params["ln_c_w"],
                     params["ln_c_b"], params["w_kv"]).reshape(B, Nc, 2 * inner)

    # rotary transcendentals hoisted out of the kernel (shared across heads)
    cos_q = jnp.cos(query_pos_emb)
    sin_q = jnp.sin(query_pos_emb)
    cos_k = jnp.cos(context_pos_emb)
    sin_k = jnp.sin(context_pos_emb)

    if context_mask is None:
        mask = jnp.ones((B, Nc), jnp.int32)
    else:
        mask = context_mask.astype(jnp.int32)

    attn = rotary_attention_pallas(
        q, kv, cos_q, sin_q, cos_k, sin_k, mask,
        num_heads=heads, rotate_value=rotate_value,
        q_tile=q_tile, kv_tile=kv_tile)

    out = pallas_linear(attn.reshape(B * Nq, inner), params["w_out"],
                        params["b_out"], out_dtype=x_query.dtype)
    return out.reshape(B, Nq, dim)


# ----------------------------------------------------------------------------
# Pure-JAX reference (mirrors the PyTorch semantics) for a sanity check
# ----------------------------------------------------------------------------
def _rotate_ref(x, pe):
    pe = pe[:, None, :, :]
    d = x.shape[-1]
    x1, x2 = x[..., : d // 2], x[..., d // 2:]
    xr = jnp.concatenate([-x2, x1], axis=-1)
    return x * jnp.cos(pe) + xr * jnp.sin(pe)


def reference_forward(params, x_query, x_context, qpe, kpe, mask,
                      *, heads, rotate_value):
    B, Nq, _ = x_query.shape
    Nc = x_context.shape[1]
    inner = params["w_q"].shape[1]
    D = inner // heads

    xq = layer_norm(x_query, params["ln_q_w"], params["ln_q_b"])
    xc = layer_norm(x_context, params["ln_c_w"], params["ln_c_b"])
    q = xq @ params["w_q"]
    kv = xc @ params["w_kv"]
    k, v = jnp.split(kv, 2, axis=-1)

    qh = q.reshape(B, Nq, heads, D).transpose(0, 2, 1, 3)
    kh = k.reshape(B, Nc, heads, D).transpose(0, 2, 1, 3)
    vh = v.reshape(B, Nc, heads, D).transpose(0, 2, 1, 3)

    qh = _rotate_ref(qh, qpe)
    kh = _rotate_ref(kh, kpe)
    if rotate_value:
        vh = _rotate_ref(vh, kpe)

    bias = jnp.where(mask, 0.0, -jnp.inf)[:, None, None, :]
    s = jnp.einsum("bhqd,bhkd->bhqk", qh, kh) / math.sqrt(D) + bias
    p = jax.nn.softmax(s, axis=-1)
    o = jnp.einsum("bhqk,bhkd->bhqd", p, vh)
    if rotate_value:
        o = _rotate_ref(o, -qpe)
    o = o.transpose(0, 2, 1, 3).reshape(B, Nq, inner)
    return o @ params["w_out"] + params["b_out"]


# ----------------------------------------------------------------------------
if __name__ == "__main__":
    key = jax.random.PRNGKey(0)

    def run_case(idx, *, B, Nq, Nc, dim, context_dim, heads, dim_head,
                 lengths, rotate_value, q_tile=256, kv_tile=512):
        ks = jax.random.split(jax.random.fold_in(key, idx), 5)
        params = init_params(ks[0], dim=dim, context_dim=context_dim,
                             heads=heads, dim_head=dim_head)
        x_query = jax.random.normal(ks[1], (B, Nq, dim), jnp.float32)
        x_context = jax.random.normal(ks[2], (B, Nc, context_dim), jnp.float32)
        qpe = jax.random.uniform(ks[3], (B, Nq, dim_head), jnp.float32,
                                 0.0, 2.0 * math.pi)
        kpe = jax.random.uniform(ks[4], (B, Nc, dim_head), jnp.float32,
                                 0.0, 2.0 * math.pi)
        lengths = jnp.asarray(lengths, jnp.int32)
        context_mask = jnp.arange(Nc)[None, :] < lengths[:, None]

        out = rotary_cross_attention_forward(
            params, x_query, x_context, qpe, kpe, context_mask,
            heads=heads, rotate_value=rotate_value,
            q_tile=q_tile, kv_tile=kv_tile)
        out = jax.block_until_ready(out)

        ref = reference_forward(params, x_query, x_context, qpe, kpe,
                                context_mask, heads=heads,
                                rotate_value=rotate_value)
        assert out.shape == (B, Nq, dim)
        assert not bool(jnp.any(jnp.isnan(out))), (idx, "NaN in output")
        # tolerance reflects bf16 MXU operands (f32 accumulation) everywhere
        assert jnp.allclose(out, ref, rtol=6e-2, atol=6e-2), (
            idx, rotate_value, float(jnp.max(jnp.abs(out - ref))))

    # config 1: single q tile, single kv tile
    run_case(0, B=2, Nq=8, Nc=16, dim=32, context_dim=24, heads=2, dim_head=16,
             lengths=[16, 10], rotate_value=True)
    run_case(1, B=2, Nq=8, Nc=16, dim=32, context_dim=24, heads=2, dim_head=16,
             lengths=[16, 10], rotate_value=False)
    # config 2: multiple q tiles (ragged) + multiple kv tiles with ragged tail
    run_case(2, B=2, Nq=12, Nc=260, dim=32, context_dim=24, heads=2,
             dim_head=16, lengths=[260, 140], rotate_value=True,
             q_tile=8, kv_tile=128)

    print("KERNEL_OK")
</pallas_src>

<mosaic_0001>
module attributes {stable_mosaic.version = 11 : i64} {
  func.func @_ln_linear_kernel(%arg0: i32, %arg1: i32, %arg2: memref<16x32xf32, #tpu.memory_space<vmem>>, %arg3: memref<1x32xf32, #tpu.memory_space<vmem>>, %arg4: memref<1x32xf32, #tpu.memory_space<vmem>>, %arg5: memref<32x32xbf16, #tpu.memory_space<vmem>>, %arg6: memref<16x32xbf16, #tpu.memory_space<vmem>>) attributes {dimension_semantics = [#tpu.dimension_semantics<parallel>, #tpu.dimension_semantics<parallel>], iteration_bounds = array<i64: 1, 1>, scalar_prefetch = 0 : i64, scratch_operands = 0 : i64, tpu.core_type = #tpu.core_type<tc>, window_params = [{transform_indices = @transform_0, window_bounds = array<i64: 16, 32>}, {pipeline_mode = #tpu.pipeline_mode<synchronous>, transform_indices = @transform_1, window_bounds = array<i64: 1, 32>}, {pipeline_mode = #tpu.pipeline_mode<synchronous>, transform_indices = @transform_2, window_bounds = array<i64: 1, 32>}, {transform_indices = @transform_3, window_bounds = array<i64: 32, 32>}, {transform_indices = @transform_4, window_bounds = array<i64: 16, 32>}]} {
    %c0 = arith.constant 0 : index
    %c0_0 = arith.constant 0 : index
    %0 = vector.load %arg2[%c0, %c0_0] : memref<16x32xf32, #tpu.memory_space<vmem>>, vector<16x32xf32>
    %cst = arith.constant dense<0.000000e+00> : vector<16xf32>
    %1 = vector.multi_reduction <add>, %0, %cst [1] : vector<16x32xf32> to vector<16xf32>
    %2 = vector.shape_cast %1 : vector<16xf32> to vector<16x1xf32>
    %cst_1 = arith.constant 3.200000e+01 : f32
    %3 = vector.broadcast %cst_1 : f32 to vector<16x1xf32>
    %4 = arith.divf %2, %3 : vector<16x1xf32>
    %5 = vector.broadcast %4 : vector<16x1xf32> to vector<16x32xf32>
    %6 = arith.subf %0, %5 : vector<16x32xf32>
    %7 = arith.mulf %6, %6 : vector<16x32xf32>
    %cst_2 = arith.constant dense<0.000000e+00> : vector<16xf32>
    %8 = vector.multi_reduction <add>, %7, %cst_2 [1] : vector<16x32xf32> to vector<16xf32>
    %9 = vector.shape_cast %8 : vector<16xf32> to vector<16x1xf32>
    %cst_3 = arith.constant 3.200000e+01 : f32
    %10 = vector.broadcast %cst_3 : f32 to vector<16x1xf32>
    %11 = arith.divf %9, %10 : vector<16x1xf32>
    %cst_4 = arith.constant 9.99999974E-6 : f32
    %12 = vector.broadcast %cst_4 : f32 to vector<16x1xf32>
    %13 = arith.addf %11, %12 : vector<16x1xf32>
    %14 = math.rsqrt %13 : vector<16x1xf32>
    %15 = vector.broadcast %14 : vector<16x1xf32> to vector<16x32xf32>
    %16 = arith.mulf %6, %15 : vector<16x32xf32>
    %c0_5 = arith.constant 0 : index
    %c0_6 = arith.constant 0 : index
    %17 = vector.load %arg3[%c0_5, %c0_6] : memref<1x32xf32, #tpu.memory_space<vmem>>, vector<1x32xf32>
    %18 = vector.broadcast %17 : vector<1x32xf32> to vector<16x32xf32>
    %19 = arith.mulf %16, %18 : vector<16x32xf32>
    %c0_7 = arith.constant 0 : index
    %c0_8 = arith.constant 0 : index
    %20 = vector.load %arg4[%c0_7, %c0_8] : memref<1x32xf32, #tpu.memory_space<vmem>>, vector<1x32xf32>
    %21 = vector.broadcast %20 : vector<1x32xf32> to vector<16x32xf32>
    %22 = arith.addf %19, %21 : vector<16x32xf32>
    %23 = arith.truncf %22 : vector<16x32xf32> to vector<16x32xbf16>
    %c0_9 = arith.constant 0 : index
    %c0_10 = arith.constant 0 : index
    %24 = vector.load %arg5[%c0_9, %c0_10] : memref<32x32xbf16, #tpu.memory_space<vmem>>, vector<32x32xbf16>
    %cst_11 = arith.constant dense<0.000000e+00> : vector<16x32xf32>
    %25 = tpu.matmul %23, %24, %cst_11 {dimension_numbers = #tpu.dot_dimension_numbers<[1], [0], [0], [1], [0, 0, 1, 1], [], []>} : vector<16x32xbf16>, vector<32x32xbf16>, vector<16x32xf32> -> vector<16x32xf32>
    %26 = arith.truncf %25 : vector<16x32xf32> to vector<16x32xbf16>
    %c0_12 = arith.constant 0 : index
    %c0_13 = arith.constant 0 : index
    %27 = vector.load %arg6[%c0_12, %c0_13] : memref<16x32xbf16, #tpu.memory_space<vmem>>, vector<16x32xbf16>
    tpu.vector_store %arg6[%c0_12, %c0_13], %26 {strides = array<i32>} : memref<16x32xbf16, #tpu.memory_space<vmem>>, vector<16x32xbf16>,
    return
  }
  func.func @transform_0(%arg0: i32, %arg1: i32) -> (i32, i32) {
    %c0_i32 = arith.constant 0 : i32
    %c0_i32_0 = arith.constant 0 : i32
    return %arg0, %c0_i32 : i32, i32
  }
  func.func @transform_1(%arg0: i32, %arg1: i32) -> (i32, i32) {
    %c0_i32 = arith.constant 0 : i32
    %c0_i32_0 = arith.constant 0 : i32
    %c0_i32_1 = arith.constant 0 : i32
    return %c0_i32, %c0_i32_0 : i32, i32
  }
  func.func @transform_2(%arg0: i32, %arg1: i32) -> (i32, i32) {
    %c0_i32 = arith.constant 0 : i32
    %c0_i32_0 = arith.constant 0 : i32
    %c0_i32_1 = arith.constant 0 : i32
    return %c0_i32, %c0_i32_0 : i32, i32
  }
  func.func @transform_3(%arg0: i32, %arg1: i32) -> (i32, i32) {
    %c0_i32 = arith.constant 0 : i32
    %c0_i32_0 = arith.constant 0 : i32
    return %c0_i32, %arg1 : i32, i32
  }
  func.func @transform_4(%arg0: i32, %arg1: i32) -> (i32, i32) {
    %c0_i32 = arith.constant 0 : i32
    return %arg0, %arg1 : i32, i32
  }
}

</mosaic_0001>

<llo_original>
// kernel: tpu_custom_call.1
$region0: #{tpu_custom_call.1}
  #allocation0 [shape = 'u32[]', space=smem, size = 0x4, offset = 0x4, fixed_abs, tag = 'smem constant byte address 0x4 - core index']
  #allocation1 [shape = 'u32[72,128]{1,0:T(1,128)}', space=vmem, size = 0x9000, scoped, tag = 'internal scratch']
  %s0 = inlined_call_operand.hbm [shape: f32[16,32], index: 0, kind: input, shape index: {}]
  %s1 = inlined_call_operand.hbm [shape: f32[1,32], index: 1, kind: input, shape index: {}]
  %s2 = inlined_call_operand.vmem [shape: f32[1,32], index: 2, kind: input, shape index: {}]
  %s3 = inlined_call_operand.hbm [shape: bf16[32,32], index: 3, kind: input, shape index: {}]
  %s4 = inlined_call_operand.hbm [shape: bf16[16,32], index: 4, kind: output, shape index: {}]
  %s5 = sld [smem:[#allocation0]]
  $region38: #{tpu_custom_call.1} parent=0
    _
  %s7 = ssub.s32 1, %s5
  %s8 = scalar_select 0, %s7, %s5
  $region1: #{tpu_custom_call.1} parent=0
    #allocation2 [shape = 'u8[8192]{0}', space=vmem, size = 0x2000, scoped, tag = 'input window, operand 0, single buffered']
    #allocation3 [shape = 's32[1]{0}', space=sflag, size = 0x4, scoped, tag = 'scoped memory for tpu_custom_call.1']
    #allocation4 [shape = 's32[1]{0}', space=sflag, size = 0x4, scoped, tag = 'scoped memory for tpu_custom_call.1']
    #allocation5 [shape = 'u8[512]{0}', space=vmem, size = 0x400, scoped, tag = 'input window, operand 1, single buffered']
    #allocation6 [shape = 's32[1]{0}', space=sflag, size = 0x4, scoped, tag = 'scoped memory for tpu_custom_call.1']
    #allocation7 [shape = 'u8[8192]{0}', space=vmem, size = 0x2000, scoped, tag = 'input window, operand 3, single buffered']
    #allocation8 [shape = 'u8[4096]{0}', space=vmem, size = 0x1000, scoped, tag = 'output window, operand 0, single buffered']
    %9 = vsyncpa [#allocation3], 0
    %10 = vsyncpa [#allocation6], 0
    %11 = vsyncpa [#allocation4], 0
    // Predicated region
    $region2: #{tpu_custom_call.1} parent=1 // pred_check
      _
    $region3: #{tpu_custom_call.1} parent=1 // pred_check_branch
      %13 = sbr.rel (0) target = $region5
    $region4: #{tpu_custom_call.1} parent=1 // pred_region
      %15 = vsyncadd [#allocation3], 0
      %s16 = sshll.u32 %s0, 4
      %s17 = int_to_ptr.hbm [resolvable:$true] %s16
      %s18 = sshll.u32 [#allocation2], 4
      %s19 = int_to_ptr.vmem [resolvable:$true] %s18
      %24 = dma.hbm_to_vmem [thread:$0]  %s17, 256, %s19, [#allocation3], 128, 128, 8
    $region5: #{tpu_custom_call.1} parent=1 // pred_fallthru
      _
    // Predicated region
    $region6: #{tpu_custom_call.1} parent=1 // pred_check
      _
    $region7: #{tpu_custom_call.1} parent=1 // pred_check_branch
      %26 = sbr.rel (0) target = $region9
    $region8: #{tpu_custom_call.1} parent=1 // pred_region
      %28 = vsyncadd [#allocation6], 0
      %s30 = sshll.u32 %s1, 4
      %s31 = int_to_ptr.hbm [resolvable:$true] %s30
      %s32 = sshll.u32 [#allocation5], 4
      %s33 = int_to_ptr.vmem [resolvable:$true] %s32
      %35 = dma.hbm_to_vmem [thread:$0]  %s31, 16, %s33, [#allocation6]
    $region9: #{tpu_custom_call.1} parent=1 // pred_fallthru
      _
    // Predicated region
    $region10: #{tpu_custom_call.1} parent=1 // pred_check
      _
    $region11: #{tpu_custom_call.1} parent=1 // pred_check_branch
      %37 = sbr.rel (0) target = $region13
    $region12: #{tpu_custom_call.1} parent=1 // pred_region
      _
    $region13: #{tpu_custom_call.1} parent=1 // pred_fallthru
      _
    // Predicated region
    $region14: #{tpu_custom_call.1} parent=1 // pred_check
      _
    $region15: #{tpu_custom_call.1} parent=1 // pred_check_branch
      %39 = sbr.rel (0) target = $region17
    $region16: #{tpu_custom_call.1} parent=1 // pred_region
      %41 = vsyncadd [#allocation6], 0
      %s42 = sshll.u32 %s3, 4
      %s43 = int_to_ptr.hbm [resolvable:$true] %s42
      %s44 = sshll.u32 [#allocation7], 4
      %s45 = int_to_ptr.vmem [resolvable:$true] %s44
      %50 = dma.hbm_to_vmem [thread:$0]  %s43, 256, %s45, [#allocation6], 64, 64, 4
    $region17: #{tpu_custom_call.1} parent=1 // pred_fallthru
      _
    // Predicated region
    $region18: #{tpu_custom_call.1} parent=1 // pred_check
      _
    $region19: #{tpu_custom_call.1} parent=1 // pred_check_branch
      %52 = sbr.rel (0) target = $region21
    $region20: #{tpu_custom_call.1} parent=1 // pred_region
      %54 = dma.done [#allocation3], 256
    $region21: #{tpu_custom_call.1} parent=1 // pred_fallthru
      _
    // Predicated region
    $region22: #{tpu_custom_call.1} parent=1 // pred_check
      _
    $region23: #{tpu_custom_call.1} parent=1 // pred_check_branch
      %56 = sbr.rel (0) target = $region25
    $region24: #{tpu_custom_call.1} parent=1 // pred_region
      %58 = dma.done [#allocation6], 16
    $region25: #{tpu_custom_call.1} parent=1 // pred_fallthru
      _
    // Predicated region
    $region26: #{tpu_custom_call.1} parent=1 // pred_check
      _
    $region27: #{tpu_custom_call.1} parent=1 // pred_check_branch
      %60 = sbr.rel (0) target = $region29
    $region28: #{tpu_custom_call.1} parent=1 // pred_region
      %62 = dma.done [#allocation6], 256
    $region29: #{tpu_custom_call.1} parent=1 // pred_fallthru
      _
    %v64 = vld [vmem:[#allocation2] sm:$0xff]
    %v65 = vld [vmem:[#allocation2 + $0x8] sm:$0xff]
    %vm66 = vcmask 261120
    %v67 = vsel %vm66, %v64, 0.0
    %68 = vadd.xlane.f32.xlu0 %v67
    %v69 = vpop.xlane.xlu0 %68
    %v70 = vsel %vm66, %v65, 0.0
    %71 = vadd.xlane.f32.xlu0 %v70
    %v72 = vpop.xlane.xlu0 %71
    %v73 = vrcp.pop 32.0
    %v74 = vmul.f32 32.0, %v73
    %v75 = vsub.f32 1.0, %v74
    %v76 = vmul.f32 %v73, %v75
    %v77 = vadd.f32 %v73, %v76
    %vm78 = vweird.f32 %v73
    %v79 = vsel %vm78, %v73, %v77
    %v80 = vmul.f32 %v69, %v79
    %v81 = vmul.f32 %v72, %v79
    %v82 = vsub.f32 %v64, %v80
    %v83 = vsub.f32 %v65, %v81
    %v84 = vmul.f32 %v82, %v82
    %v85 = vmul.f32 %v83, %v83
    %v86 = vsel %vm66, %v84, 0.0
    %87 = vadd.xlane.f32.xlu0 %v86
    %v88 = vpop.xlane.xlu0 %87
    %v89 = vsel %vm66, %v85, 0.0
    %90 = vadd.xlane.f32.xlu0 %v89
    %v91 = vpop.xlane.xlu0 %90
    %v92 = vmul.f32 %v88, %v79
    %v93 = vmul.f32 %v91, %v79
    %v94 = vadd.f32 %v92, 1e-05
    %v95 = vadd.f32 %v93, 1e-05
    %v96 = vrsqrt.pop %v94
    %v97 = vmul.f32 %v96, %v94
    %v98 = vmul.f32 %v97, %v96
    %v99 = vmul.f32 0.5, %v98
    %v100 = vsub.f32 1.5, %v99
    %v101 = vmul.f32 %v96, %v100
    %vm102 = vweird.f32 %v94
    %vm103 = vweird.f32 %v96
    %vm104 = vmor %vm102, %vm103
    %v105 = vsel %vm104, %v96, %v101
    %v106 = vrsqrt.pop %v95
    %v107 = vmul.f32 %v106, %v95
    %v108 = vmul.f32 %v107, %v106
    %v109 = vmul.f32 0.5, %v108
    %v110 = vsub.f32 1.5, %v109
    %v111 = vmul.f32 %v106, %v110
    %vm112 = vweird.f32 %v95
    %vm113 = vweird.f32 %v106
    %vm114 = vmor %vm112, %vm113
    %v115 = vsel %vm114, %v106, %v111
    %v116 = vmul.f32 %v82, %v105
    %v117 = vmul.f32 %v83, %v115
    %v118 = vld [vmem:[#allocation5] sm:$0x1]
    %v120 = vperm.slane %v118, 0
    %v122 = vmul.f32 %v116, %v120
    %v123 = vmul.f32 %v117, %v120
    %v124 = vld [vmem:[%s2] sm:$0x1]
    %v126 = vperm.slane %v124, 0
    %v128 = vadd.f32 %v122, %v126
    %v129 = vadd.f32 %v123, %v126
    %v130 = vpack.c.bf16 %v129, %v128
    %v131 = vld [vmem:[#allocation7] sm:$0xf]
    %v132 = vld [vmem:[#allocation7 + $0x4] sm:$0xf]
    %v133 = vld [vmem:[#allocation7 + $0x8] sm:$0xf]
    %v134 = vld [vmem:[#allocation7 + $0xc] sm:$0xf]
    %v139 = vunpack.c.l.b16 %v131
    %v140 = vunpack.c.l.b16 %v132
    %v141 = vunpack.c.l.b16 %v133
    %v142 = vunpack.c.l.b16 %v134
    %v143 = vpack.c.b16 %v140, %v139
    %v144 = vpack.c.b16 %v142, %v141
    %v148 = vsel %vm66, %v130, 0
    %150 = vmatpush.bf16.msra.mxu0 0
    %151 = vmatpush.bf16.msra.mxu0 0
    %152 = vmatpush.bf16.msra.mxu0 0
    %153 = vmatpush.bf16.msra.mxu0 0
    %154 = vmatpush.bf16.msra.mxu0 0
    %155 = vmatpush.bf16.msra.mxu0 0
    %156 = vmatpush.bf16.msra.mxu0 %v144
    %157 = vmatpush.bf16.msra.mxu0 %v143
    %158 = vmatmul.bf16.gmra.mxu0 %v148
    %v159 = vpop.f32.mrf.mxu0
    %v160 = vadd.f32 0.0, %v159
    %v161 = vpop.f32.mrf.mxu0
    %v162 = vadd.f32 0.0, %v161
    %163 = vdwg.mxu0
    %v164 = vpack.c.bf16 %v160, %v160
    %v165 = vpack.c.bf16 %v162, %v162
    %vm166 = vcmask 257024
    %167 = vst.msk [vmem:[#allocation8] sm:$0xf] %vm166, %v164
    %168 = vst.msk [vmem:[#allocation8 + $0x4] sm:$0xf] %vm166, %v165
    // Predicated region
    $region30: #{tpu_custom_call.1} parent=1 // pred_check
      _
    $region31: #{tpu_custom_call.1} parent=1 // pred_check_branch
      %170 = sbr.rel (0) target = $region33
    $region32: #{tpu_custom_call.1} parent=1 // pred_region
      %172 = vsyncadd [#allocation4], 0
      %s173 = sshll.u32 [#allocation8], 4
      %s174 = int_to_ptr.vmem [resolvable:$true] %s173
      %s175 = sshll.u32 %s4, 4
      %s176 = int_to_ptr.hbm [resolvable:$true] %s175
      %181 = dma.vmem_to_hbm [thread:$0]  %s174, 128, %s176, [#allocation4], 64, 64, 4
    $region33: #{tpu_custom_call.1} parent=1 // pred_fallthru
      _
    // Predicated region
    $region34: #{tpu_custom_call.1} parent=1 // pred_check
      _
    $region35: #{tpu_custom_call.1} parent=1 // pred_check_branch
      %183 = sbr.rel (0) target = $region37
    $region36: #{tpu_custom_call.1} parent=1 // pred_region
      %185 = dma.done [#allocation4], 128
    $region37: #{tpu_custom_call.1} parent=1 // pred_fallthru
      _
    %186 = vsyncpa [#allocation3], 1
    %187 = vsyncpa [#allocation6], 1
    %188 = vsyncpa [#allocation4], 1

</llo_original>
